<compile_context>
chip_gen: v5e
topology: v5e:2x2
jax: 0.10.0
libtpu: 0.0.40
codegen_flags: <defaults>
</compile_context>

<pallas_src>
import jax
import jax.numpy as jnp
from jax.experimental import pallas as pl
from jax.experimental.pallas import tpu as pltpu

_PACK = 8                                   # default sublane packing (N, D) -> (N*8, D/8)
_VMEM_LIMIT = 32 * 1024 * 1024              # scoped VMEM limit (safe on v5e/v6e/v7x)
_PIPELINE_VMEM_BUDGET = _VMEM_LIMIT // 2    # 2 inputs x 2 pipeline buffers live in this


def _row_block_for(*dtypes):
    """Rows per block = native sublane packing depth of the narrowest input."""
    min_bytes = min(jnp.dtype(dt).itemsize for dt in dtypes)
    if min_bytes <= 1:
        return 32
    if min_bytes <= 2:
        return 16
    return 8


def _choose_tile(row_width, row_block, *, vmem_budget=_PIPELINE_VMEM_BUDGET,
                 max_tile=131072):
    """Pick (tile, steps): tile a multiple of 128, tile*steps >= row_width.

    The cap is sized as if both inputs were f32 (8 B/elem for 2 inputs) so the
    double-buffered pipeline stays under `vmem_budget` and there is headroom
    for the in-kernel f32 temporaries when inputs are bf16/int8."""
    cap = vmem_budget // (2 * row_block * 8)
    cap = max(128, (cap // 128) * 128)
    cap = min(cap, max(128, (max_tile // 128) * 128))
    steps = -(-row_width // cap)
    per_step = -(-row_width // steps)
    tile = ((per_step + 127) // 128) * 128
    return tile, steps


def _make_kernel(tile, steps, valid_width):
    """Kernel accumulating per packed-row partials over the D (lane) axis."""
    last_width = valid_width - (steps - 1) * tile
    ragged = last_width != tile  # last D block only partially filled by Pallas

    def kernel(logits_ref, targets_ref, inter_ref, msum_ref):
        j = pl.program_id(1)

        @pl.when(j == 0)
        def _():
            inter_ref[...] = jnp.zeros_like(inter_ref)
            msum_ref[...] = jnp.zeros_like(msum_ref)

        x = logits_ref[...]
        t = targets_ref[...].astype(jnp.float32)

        # sigmoid(x) == 0.5 * (tanh(0.5 * x) + 1): one EUP push instead of two.
        if jnp.issubdtype(x.dtype, jnp.floating):
            probs = (0.5 * (jnp.tanh(0.5 * x) + 1.0)).astype(jnp.float32)
        else:
            probs = 0.5 * (jnp.tanh(0.5 * x.astype(jnp.float32)) + 1.0)

        if ragged:
            # Pallas does not zero-fill out-of-bounds lanes of a partial
            # block -> mask the garbage lanes of the last D step to 0 before
            # the sums (cheap VPU work, hidden under the HBM DMA).
            lane = jax.lax.broadcasted_iota(jnp.int32, probs.shape, 1)
            limit = jnp.where(j == steps - 1, last_width, tile)
            valid = lane < limit
            probs = jnp.where(valid, probs, 0.0)
            t = jnp.where(valid, t, 0.0)

        inter_ref[...] += jnp.sum(probs * t, axis=1, keepdims=True)
        msum_ref[...] += jnp.sum(probs + t, axis=1, keepdims=True)

    return kernel


@jax.jit
def soft_dice_loss(logits, targets):
    """logits, targets: (N, ...) arrays (e.g. NCHW).  Returns scalar f32 loss."""
    n = logits.shape[0]
    d = 1
    for s in logits.shape[1:]:
        d *= s

    rb_target = _row_block_for(logits.dtype, targets.dtype)

    # Sublane packing factor: largest power of two <= _PACK dividing D.
    pack = _PACK
    while pack > 1 and d % pack != 0:
        pack //= 2
    # v7x: keep the "parallel" row axis >= 2 blocks for tiny batches so both
    # TensorCores get work (zero extra HBM traffic; keep rows >= 128 lanes).
    while (n * pack) < 2 * rb_target and d % (pack * 2) == 0 and (d // (pack * 2)) >= 128:
        pack *= 2

    rows = n * pack
    row_width = d // pack

    # Row block must divide the packed row count (or span it entirely).
    row_block = rb_target
    while row_block > 8 and rows % row_block != 0:
        row_block //= 2
    if rows % row_block != 0:
        row_block = rows

    tile, steps = _choose_tile(row_width, row_block)

    # Free, row-major metadata reshapes — no HBM copies, no padding.
    logits_p = logits.reshape(rows, row_width)
    targets_p = targets.reshape(rows, row_width)

    grid = (rows // row_block, steps)
    kernel = _make_kernel(tile, steps, row_width)

    inter_part, msum_part = pl.pallas_call(
        kernel,
        out_shape=(jax.ShapeDtypeStruct((rows, 1), jnp.float32),
                   jax.ShapeDtypeStruct((rows, 1), jnp.float32)),
        grid_spec=pltpu.PrefetchScalarGridSpec(
            num_scalar_prefetch=0,
            grid=grid,
            in_specs=[
                pl.BlockSpec((row_block, tile), lambda i, j: (i, j)),
                pl.BlockSpec((row_block, tile), lambda i, j: (i, j)),
            ],
            out_specs=[
                pl.BlockSpec((row_block, 1), lambda i, j: (i, 0)),
                pl.BlockSpec((row_block, 1), lambda i, j: (i, 0)),
            ],
        ),
        compiler_params=pltpu.CompilerParams(
            dimension_semantics=("parallel", "arbitrary"),
            vmem_limit_bytes=_VMEM_LIMIT,
        ),
    )(logits_p, targets_p)

    # Fold the packed sub-rows back into their original row, then finish the
    # dice formula (tiny; done in plain JAX).
    inter = inter_part.reshape(n, pack).sum(axis=1)
    msum = msum_part.reshape(n, pack).sum(axis=1)
    smooth = jnp.float32(1.0)
    score = 2.0 * (inter + smooth) / (msum + smooth)
    return (1.0 - jnp.sum(score) / n).astype(jnp.float32)


def soft_dice_loss_ref(logits, targets):
    """Pure-JAX reference mirroring the PyTorch forward."""
    num = targets.shape[0]
    smooth = 1.0
    probs = jax.nn.sigmoid(logits)
    m1 = probs.reshape(num, -1)
    m2 = targets.reshape(num, -1)
    intersection = m1 * m2
    score = 2.0 * (intersection.sum(1) + smooth) / (m1.sum(1) + m2.sum(1) + smooth)
    return 1.0 - score.sum() / num


if __name__ == "__main__":
    key = jax.random.PRNGKey(0)

    def _check(shape):
        k1, k2 = jax.random.split(jax.random.fold_in(key, shape[-1] * shape[-2]))
        logits = jax.random.normal(k1, shape, dtype=jnp.float32)
        # binary-ish targets, like a segmentation mask
        targets = (jax.random.uniform(k2, shape) > 0.5).astype(jnp.float32)
        loss = jax.block_until_ready(soft_dice_loss(logits, targets))
        ref = soft_dice_loss_ref(logits, targets)
        assert jnp.allclose(loss, ref, atol=1e-5, rtol=1e-5), (shape, loss, ref)

    # Primary shape implied by the module (NCHW segmentation logits).
    _check((2, 4, 16, 16))
    # Ragged D (H*W not a multiple of 128): exercises the in-kernel lane mask.
    _check((2, 4, 10, 10))
    # Odd D: exercises the no-pack / full-extent-row-block fallback.
    _check((2, 3, 13, 11))

    print("KERNEL_OK")
</pallas_src>

<mosaic_0001>
module attributes {stable_mosaic.version = 11 : i64} {
  func.func @kernel(%arg0: i32, %arg1: i32, %arg2: memref<8x128xf32, #tpu.memory_space<vmem>>, %arg3: memref<8x128xf32, #tpu.memory_space<vmem>>, %arg4: memref<8x1xf32, #tpu.memory_space<vmem>>, %arg5: memref<8x1xf32, #tpu.memory_space<vmem>>) attributes {dimension_semantics = [#tpu.dimension_semantics<parallel>, #tpu.dimension_semantics<arbitrary>], iteration_bounds = array<i64: 2, 1>, scalar_prefetch = 0 : i64, scratch_operands = 0 : i64, tpu.core_type = #tpu.core_type<tc>, window_params = [{transform_indices = @transform_0, window_bounds = array<i64: 8, 128>}, {transform_indices = @transform_1, window_bounds = array<i64: 8, 128>}, {transform_indices = @transform_2, window_bounds = array<i64: 8, 1>}, {transform_indices = @transform_3, window_bounds = array<i64: 8, 1>}]} {
    %c0_i32 = arith.constant 0 : i32
    %0 = arith.cmpi eq, %arg1, %c0_i32 : i32
    %1 = arith.extui %0 : i1 to i32
    %c0_i32_0 = arith.constant 0 : i32
    %2 = arith.cmpi ne, %1, %c0_i32_0 : i32
    scf.if %2 {
      %cst_16 = arith.constant 0.000000e+00 : f32
      %24 = vector.broadcast %cst_16 : f32 to vector<8x1xf32>
      %c0_17 = arith.constant 0 : index
      %c0_18 = arith.constant 0 : index
      %25 = vector.load %arg4[%c0_17, %c0_18] : memref<8x1xf32, #tpu.memory_space<vmem>>, vector<8x1xf32>
      tpu.vector_store %arg4[%c0_17, %c0_18], %24 {strides = array<i32>} : memref<8x1xf32, #tpu.memory_space<vmem>>, vector<8x1xf32>,
      %cst_19 = arith.constant 0.000000e+00 : f32
      %26 = vector.broadcast %cst_19 : f32 to vector<8x1xf32>
      %c0_20 = arith.constant 0 : index
      %c0_21 = arith.constant 0 : index
      %27 = vector.load %arg5[%c0_20, %c0_21] : memref<8x1xf32, #tpu.memory_space<vmem>>, vector<8x1xf32>
      tpu.vector_store %arg5[%c0_20, %c0_21], %26 {strides = array<i32>} : memref<8x1xf32, #tpu.memory_space<vmem>>, vector<8x1xf32>,
    } else {
    }
    %c0 = arith.constant 0 : index
    %c0_1 = arith.constant 0 : index
    %3 = vector.load %arg2[%c0, %c0_1] : memref<8x128xf32, #tpu.memory_space<vmem>>, vector<8x128xf32>
    %c0_2 = arith.constant 0 : index
    %c0_3 = arith.constant 0 : index
    %4 = vector.load %arg3[%c0_2, %c0_3] : memref<8x128xf32, #tpu.memory_space<vmem>>, vector<8x128xf32>
    %cst = arith.constant 5.000000e-01 : f32
    %5 = vector.broadcast %cst : f32 to vector<8x128xf32>
    %6 = arith.mulf %5, %3 : vector<8x128xf32>
    %7 = math.tanh %6 : vector<8x128xf32>
    %cst_4 = arith.constant 1.000000e+00 : f32
    %8 = vector.broadcast %cst_4 : f32 to vector<8x128xf32>
    %9 = arith.addf %7, %8 : vector<8x128xf32>
    %cst_5 = arith.constant 5.000000e-01 : f32
    %10 = vector.broadcast %cst_5 : f32 to vector<8x128xf32>
    %11 = arith.mulf %10, %9 : vector<8x128xf32>
    %c0_6 = arith.constant 0 : index
    %c0_7 = arith.constant 0 : index
    %12 = vector.load %arg4[%c0_6, %c0_7] : memref<8x1xf32, #tpu.memory_space<vmem>>, vector<8x1xf32>
    %13 = arith.mulf %11, %4 : vector<8x128xf32>
    %cst_8 = arith.constant dense<0.000000e+00> : vector<8xf32>
    %14 = vector.multi_reduction <add>, %13, %cst_8 [1] : vector<8x128xf32> to vector<8xf32>
    %15 = vector.shape_cast %14 : vector<8xf32> to vector<8x1xf32>
    %16 = arith.addf %12, %15 : vector<8x1xf32>
    %c0_9 = arith.constant 0 : index
    %c0_10 = arith.constant 0 : index
    %17 = vector.load %arg4[%c0_9, %c0_10] : memref<8x1xf32, #tpu.memory_space<vmem>>, vector<8x1xf32>
    tpu.vector_store %arg4[%c0_9, %c0_10], %16 {strides = array<i32>} : memref<8x1xf32, #tpu.memory_space<vmem>>, vector<8x1xf32>,
    %c0_11 = arith.constant 0 : index
    %c0_12 = arith.constant 0 : index
    %18 = vector.load %arg5[%c0_11, %c0_12] : memref<8x1xf32, #tpu.memory_space<vmem>>, vector<8x1xf32>
    %19 = arith.addf %11, %4 : vector<8x128xf32>
    %cst_13 = arith.constant dense<0.000000e+00> : vector<8xf32>
    %20 = vector.multi_reduction <add>, %19, %cst_13 [1] : vector<8x128xf32> to vector<8xf32>
    %21 = vector.shape_cast %20 : vector<8xf32> to vector<8x1xf32>
    %22 = arith.addf %18, %21 : vector<8x1xf32>
    %c0_14 = arith.constant 0 : index
    %c0_15 = arith.constant 0 : index
    %23 = vector.load %arg5[%c0_14, %c0_15] : memref<8x1xf32, #tpu.memory_space<vmem>>, vector<8x1xf32>
    tpu.vector_store %arg5[%c0_14, %c0_15], %22 {strides = array<i32>} : memref<8x1xf32, #tpu.memory_space<vmem>>, vector<8x1xf32>,
    return
  }
  func.func @transform_0(%arg0: i32, %arg1: i32) -> (i32, i32) {
    %c0_i32 = arith.constant 0 : i32
    return %arg0, %arg1 : i32, i32
  }
  func.func @transform_1(%arg0: i32, %arg1: i32) -> (i32, i32) {
    %c0_i32 = arith.constant 0 : i32
    return %arg0, %arg1 : i32, i32
  }
  func.func @transform_2(%arg0: i32, %arg1: i32) -> (i32, i32) {
    %c0_i32 = arith.constant 0 : i32
    %c0_i32_0 = arith.constant 0 : i32
    return %arg0, %c0_i32 : i32, i32
  }
  func.func @transform_3(%arg0: i32, %arg1: i32) -> (i32, i32) {
    %c0_i32 = arith.constant 0 : i32
    %c0_i32_0 = arith.constant 0 : i32
    return %arg0, %c0_i32 : i32, i32
  }
}

</mosaic_0001>

<llo_original>
// kernel: soft_dice_loss.1
$region0: #{soft_dice_loss.1}
  #allocation0 [shape = 'u32[]', space=smem, size = 0x4, offset = 0x4, fixed_abs, tag = 'smem constant byte address 0x4 - core index']
  #allocation1 [shape = 'u32[72,128]{1,0:T(1,128)}', space=vmem, size = 0x9000, scoped, tag = 'internal scratch']
  %s0 = inlined_call_operand.vmem [shape: f32[16,128], index: 0, kind: input, shape index: {}]
  %s1 = inlined_call_operand.vmem [shape: f32[16,128], index: 1, kind: input, shape index: {}]
  %s2 = inlined_call_operand.vmem [shape: f32[16,1], index: 2, kind: output, shape index: {0}]
  %s3 = inlined_call_operand.vmem [shape: f32[16,1], index: 3, kind: output, shape index: {1}]
  %4 = xla_tuple %s2, %s3
  %s5 = sld [smem:[#allocation0]]
  $region53: #{soft_dice_loss.1} parent=0
    _
  %s7 = ssub.s32 1, %s5
  %s8 = scalar_select 0, %s7, %s5
  loop: start=0, step=1, limit=4
  $region2: #{soft_dice_loss.1} parent=0 // loop_pre_header
    _
  $region3: #{soft_dice_loss.1} parent=0 // loop_header
    %s10 = sphi 0, %s14
    %p11 = scmp.ge.s32.totalorder %s10, 4
    %s17 = sphi 0, %s29
    %s18 = sphi 0, %s25
    %s19 = sphi 0, %s17
    %s20 = sphi 0, %s18
    %s21 = sphi 0, %s19
    %s22 = sphi 0, %s20
    %s34 = sphi 0, %s36
    %s37 = sphi 0, %s34
    %s38 = sphi 0, %s37
    %s54 = sphi 0, %s38
    %s62 = sphi 0, %s64
    %s65 = sphi 0, %s62
    %s66 = sphi 0, %s65
    %s82 = sphi 0, %s66
    %s88 = sphi 0, %s90
    %s91 = sphi 0, %s88
    %s92 = sphi 0, %s91
    %s108 = sphi 0, %s92
    %s114 = sphi 0, %s116
    %s117 = sphi 0, %s114
    %s118 = sphi 0, %s117
    %s134 = sphi 0, %s118
  $region4: #{soft_dice_loss.1} parent=0 // loop_header_branch
    %13 = sbr.rel (%p11) target = $region8
  $region5: #{soft_dice_loss.1} parent=0 // loop_body
    %s15 = ssub.s32 %s10, 1
    %s16 = ssub.s32 %s10, 2
    %s23 = sadd.s32 1, %s18
    %p24 = scmp.ge.s32.totalorder %s23, 1
    %s25 = scalar_select %p24, 0, %s23
    %s26 = sadd.s32 1, %s17
    %s27 = scalar_select %p24, %s26, %s17
    %p28 = scmp.ge.s32.totalorder %s27, 2
    %s29 = scalar_select %p28, 0, %s27
    %s30 = ssub.s32 %s17, %s29
    %s31 = ssub.s32 %s18, %s25
    %s32 = sor.u32 %s30, %s31
    %p33 = scmp.eq.s32.totalorder %s32, 0
    %s35 = sadd.s32 %s34, 1
    %s36 = scalar_select %p33, %s34, %s35
    %p39 = pneg %p33
    %p40 = scmp.eq.s32.totalorder %s10, 1
    %p41 = por %p39, %p40
    %p42 = scmp.ne.s32.totalorder %s34, %s37
    %p43 = scmp.eq.s32.totalorder %s10, 0
    %p44 = por %p42, %p43
    %p45 = scmp.ne.s32.totalorder %s34, %s37
    %p46 = scmp.eq.s32.totalorder %s15, 1
    %p47 = por %p45, %p46
    %p48 = scmp.ne.s32.totalorder %s37, %s38
    %p49 = scmp.eq.s32.totalorder %s15, 0
    %p50 = por %p48, %p49
    %p51 = scmp.ne.s32.totalorder %s37, %s38
    %p52 = scmp.eq.s32.totalorder %s16, 1
    %p53 = por %p51, %p52
    %p55 = scmp.ne.s32.totalorder %s38, %s54
    %p56 = scmp.eq.s32.totalorder %s16, 0
    %p57 = por %p55, %p56
    %s58 = ssub.s32 %s17, %s29
    %s59 = ssub.s32 %s18, %s25
    %s60 = sor.u32 %s58, %s59
    %p61 = scmp.eq.s32.totalorder %s60, 0
    %s63 = sadd.s32 %s62, 1
    %s64 = scalar_select %p61, %s62, %s63
    %p67 = pneg %p61
    %p68 = scmp.eq.s32.totalorder %s10, 1
    %p69 = por %p67, %p68
    %p70 = scmp.ne.s32.totalorder %s62, %s65
    %p71 = scmp.eq.s32.totalorder %s10, 0
    %p72 = por %p70, %p71
    %p73 = scmp.ne.s32.totalorder %s62, %s65
    %p74 = scmp.eq.s32.totalorder %s15, 1
    %p75 = por %p73, %p74
    %p76 = scmp.ne.s32.totalorder %s65, %s66
    %p77 = scmp.eq.s32.totalorder %s15, 0
    %p78 = por %p76, %p77
    %p79 = scmp.ne.s32.totalorder %s65, %s66
    %p80 = scmp.eq.s32.totalorder %s16, 1
    %p81 = por %p79, %p80
    %p83 = scmp.ne.s32.totalorder %s66, %s82
    %p84 = scmp.eq.s32.totalorder %s16, 0
    %p85 = por %p83, %p84
    %s86 = ssub.s32 %s17, %s29
    %p87 = scmp.eq.s32.totalorder %s86, 0
    %s89 = sadd.s32 %s88, 1
    %s90 = scalar_select %p87, %s88, %s89
    %p93 = pneg %p87
    %p94 = scmp.eq.s32.totalorder %s10, 1
    %p95 = por %p93, %p94
    %p96 = scmp.ne.s32.totalorder %s88, %s91
    %p97 = scmp.eq.s32.totalorder %s10, 0
    %p98 = por %p96, %p97
    %p99 = scmp.ne.s32.totalorder %s88, %s91
    %p100 = scmp.eq.s32.totalorder %s15, 1
    %p101 = por %p99, %p100
    %p102 = scmp.ne.s32.totalorder %s91, %s92
    %p103 = scmp.eq.s32.totalorder %s15, 0
    %p104 = por %p102, %p103
    %p105 = scmp.ne.s32.totalorder %s91, %s92
    %p106 = scmp.eq.s32.totalorder %s16, 1
    %p107 = por %p105, %p106
    %p109 = scmp.ne.s32.totalorder %s92, %s108
    %p110 = scmp.eq.s32.totalorder %s16, 0
    %p111 = por %p109, %p110
    %s112 = ssub.s32 %s17, %s29
    %p113 = scmp.eq.s32.totalorder %s112, 0
    %s115 = sadd.s32 %s114, 1
    %s116 = scalar_select %p113, %s114, %s115
    %p119 = pneg %p113
    %p120 = scmp.eq.s32.totalorder %s10, 1
    %p121 = por %p119, %p120
    %p122 = scmp.ne.s32.totalorder %s114, %s117
    %p123 = scmp.eq.s32.totalorder %s10, 0
    %p124 = por %p122, %p123
    %p125 = scmp.ne.s32.totalorder %s114, %s117
    %p126 = scmp.eq.s32.totalorder %s15, 1
    %p127 = por %p125, %p126
    %p128 = scmp.ne.s32.totalorder %s117, %s118
    %p129 = scmp.eq.s32.totalorder %s15, 0
    %p130 = por %p128, %p129
    %p131 = scmp.ne.s32.totalorder %s117, %s118
    %p132 = scmp.eq.s32.totalorder %s16, 1
    %p133 = por %p131, %p132
    %p135 = scmp.ne.s32.totalorder %s118, %s134
    %p136 = scmp.eq.s32.totalorder %s16, 0
    %p137 = por %p135, %p136
    %p138 = scmp.le.s32.totalorder 1, %s10
    %p139 = scmp.lt.s32.totalorder %s10, 3
    %p140 = pnand %p138, %p139
    %p141 = pneg %p140
    // Predicated region
    $region9: #{soft_dice_loss.1} parent=5 // pred_check
      _
    $region10: #{soft_dice_loss.1} parent=5 // pred_check_branch
      %143 = sbr.rel (%p140) target = $region12
    $region11: #{soft_dice_loss.1} parent=5 // pred_region
      %s144 = ssub.s32 %s10, 1
    $region12: #{soft_dice_loss.1} parent=5 // pred_fallthru
      _
    %p145 = scmp.lt.s32.totalorder %s10, 2
    // Predicated region
    $region13: #{soft_dice_loss.1} parent=5 // pred_check
      %p146 = pneg %p145
    $region14: #{soft_dice_loss.1} parent=5 // pred_check_branch
      %148 = sbr.rel (%p146) target = $region16
    $region15: #{soft_dice_loss.1} parent=5 // pred_region
      // Predicated region
      $region17: #{soft_dice_loss.1} parent=15 // pred_check
        %p149 = pneg %p44
      $region18: #{soft_dice_loss.1} parent=15 // pred_check_branch
        %151 = sbr.rel (%p149) target = $region20
      $region19: #{soft_dice_loss.1} parent=15 // pred_region
        %p152 = scmp.lt.s32.totalorder %s17, 1
        %s153 = scalar_select %p152, %s17, 1
        %p154 = scmp.lt.s32.totalorder %s18, 0
        %s155 = scalar_select %p154, %s18, 0
        %s156 = sadd.s32 %s155, %s153
        %s157 = smul.addr %s156, 8
        %s158 = scalar_lea.vmem %s0, %s157
      $region20: #{soft_dice_loss.1} parent=15 // pred_fallthru
        _
      // Predicated region
      $region21: #{soft_dice_loss.1} parent=15 // pred_check
        %p159 = pneg %p72
      $region22: #{soft_dice_loss.1} parent=15 // pred_check_branch
        %161 = sbr.rel (%p159) target = $region24
      $region23: #{soft_dice_loss.1} parent=15 // pred_region
        %p162 = scmp.lt.s32.totalorder %s17, 1
        %s163 = scalar_select %p162, %s17, 1
        %p164 = scmp.lt.s32.totalorder %s18, 0
        %s165 = scalar_select %p164, %s18, 0
        %s166 = sadd.s32 %s165, %s163
        %s167 = smul.addr %s166, 8
        %s168 = scalar_lea.vmem %s1, %s167
      $region24: #{soft_dice_loss.1} parent=15 // pred_fallthru
        _
    $region16: #{soft_dice_loss.1} parent=5 // pred_fallthru
      _
    %p169 = scmp.le.s32.totalorder 1, %s10
    %p170 = scmp.lt.s32.totalorder %s10, 3
    %p171 = pnand %p169, %p170
    %p172 = pneg %p171
    // Predicated region
    $region25: #{soft_dice_loss.1} parent=5 // pred_check
      _
    $region26: #{soft_dice_loss.1} parent=5 // pred_check_branch
      %174 = sbr.rel (%p171) target = $region28
    $region27: #{soft_dice_loss.1} parent=5 // pred_region
      %s175 = ssub.s32 %s10, 1
      %p176 = scmp.lt.s32.totalorder %s19, 1
      %s177 = scalar_select %p176, %s19, 1
      %p178 = scmp.lt.s32.totalorder %s20, 0
      %s179 = scalar_select %p178, %s20, 0
      %s180 = sadd.s32 %s179, %s177
      %s181 = smul.addr %s180, 8
      %s182 = scalar_lea.vmem %s0, %s181
      %p183 = pneg %p50
      %p184 = pneg %p47
      %p185 = scmp.lt.s32.totalorder %s19, 1
      %s186 = scalar_select %p185, %s19, 1
      %p187 = scmp.lt.s32.totalorder %s20, 0
      %s188 = scalar_select %p187, %s20, 0
      %s189 = sadd.s32 %s188, %s186
      %s190 = smul.addr %s189, 8
      %s191 = scalar_lea.vmem %s1, %s190
      %p192 = pneg %p78
      %p193 = pneg %p75
      %p194 = pneg %p104
      %p195 = pneg %p101
      %p196 = scmp.lt.s32.totalorder %s19, 1
      %s197 = scalar_select %p196, %s19, 1
      %s198 = smul.addr %s197, 8
      %s199 = scalar_lea.vmem %s2, %s198
      %p200 = pneg %p130
      %p201 = pneg %p127
      %p202 = scmp.lt.s32.totalorder %s19, 1
      %s203 = scalar_select %p202, %s19, 1
      %s204 = smul.addr %s203, 8
      %s205 = scalar_lea.vmem %s3, %s204
      %p206 = scmp.lt.s32.totalorder %s19, 1
      %s207 = scalar_select %p206, %s19, 1
      %p208 = scmp.lt.s32.totalorder %s20, 0
      %s209 = scalar_select %p208, %s20, 0
      %s210 = sadd.s32 %s209, %s207
      %s211 = smul.addr %s210, 8
      %s212 = scalar_lea.vmem %s0, %s211
      %p213 = scmp.lt.s32.totalorder %s19, 1
      %s214 = scalar_select %p213, %s19, 1
      %p215 = scmp.lt.s32.totalorder %s20, 0
      %s216 = scalar_select %p215, %s20, 0
      %s217 = sadd.s32 %s216, %s214
      %s218 = smul.addr %s217, 8
      %s219 = scalar_lea.vmem %s1, %s218
      %p220 = scmp.lt.s32.totalorder %s19, 1
      %s221 = scalar_select %p220, %s19, 1
      %s222 = smul.addr %s221, 8
      %s223 = scalar_lea.vmem %s2, %s222
      %p224 = scmp.lt.s32.totalorder %s19, 1
      %s225 = scalar_select %p224, %s19, 1
      %s226 = smul.addr %s225, 8
      %s227 = scalar_lea.vmem %s3, %s226
      %p228 = scmp.eq.s32.totalorder %s20, 0
      // Predicated region
      $region29: #{soft_dice_loss.1} parent=27 // pred_check
        %p229 = pneg %p228
      $region30: #{soft_dice_loss.1} parent=27 // pred_check_branch
        %231 = sbr.rel (%p229) target = $region32
      $region31: #{soft_dice_loss.1} parent=27 // pred_region
        %vm232 = vcmask 7168
        %233 = vst.msk [vmem:[%s223] sm:$0xff] %vm232, 0.0
        %234 = vst.msk [vmem:[%s227] sm:$0xff] %vm232, 0.0
      $region32: #{soft_dice_loss.1} parent=27 // pred_fallthru
        _
      %v235 = vld [vmem:[%s212] sm:$0xff]
      %v236 = vld [vmem:[%s219] sm:$0xff]
      %v237 = vmul.f32 %v235, 0.5
      %v238 = vtanh.pop %v237
      %v239 = vadd.f32 %v238, 1.0
      %v240 = vmul.f32 %v239, 0.5
      %v241 = vld [vmem:[%s223] sm:$0xff]
      %v242 = vmul.f32 %v240, %v236
      %243 = vadd.xlane.f32.xlu0 %v242
      %v244 = vpop.xlane.xlu0 %243
      %v245 = vadd.f32 %v241, %v244
      %vm246 = vcmask 7168
      %247 = vst.msk [vmem:[%s223] sm:$0xff] %vm246, %v245
      %v248 = vld [vmem:[%s227] sm:$0xff]
      %v249 = vadd.f32 %v240, %v236
      %250 = vadd.xlane.f32.xlu0 %v249
      %v251 = vpop.xlane.xlu0 %250
      %v252 = vadd.f32 %v248, %v251
      %253 = vst.msk [vmem:[%s227] sm:$0xff] %vm246, %v252
      %p254 = scmp.lt.s32.totalorder %s19, 1
      %s255 = scalar_select %p254, %s19, 1
      %s256 = smul.addr %s255, 8
      %s257 = scalar_lea.vmem %s2, %s256
      %p258 = scmp.lt.s32.totalorder %s19, 1
      %s259 = scalar_select %p258, %s19, 1
      %s260 = smul.addr %s259, 8
      %s261 = scalar_lea.vmem %s3, %s260
      // Predicated region
      $region33: #{soft_dice_loss.1} parent=27 // pred_check
        %p262 = pneg %p101
      $region34: #{soft_dice_loss.1} parent=27 // pred_check_branch
        %264 = sbr.rel (%p262) target = $region36
      $region35: #{soft_dice_loss.1} parent=27 // pred_region
        _
      $region36: #{soft_dice_loss.1} parent=27 // pred_fallthru
        _
      // Predicated region
      $region37: #{soft_dice_loss.1} parent=27 // pred_check
        %p265 = pneg %p127
      $region38: #{soft_dice_loss.1} parent=27 // pred_check_branch
        %267 = sbr.rel (%p265) target = $region40
      $region39: #{soft_dice_loss.1} parent=27 // pred_region
        _
      $region40: #{soft_dice_loss.1} parent=27 // pred_fallthru
        _
    $region28: #{soft_dice_loss.1} parent=5 // pred_fallthru
      _
    %p268 = scmp.le.s32.totalorder 2, %s10
    // Predicated region
    $region41: #{soft_dice_loss.1} parent=5 // pred_check
      %p269 = pneg %p268
    $region42: #{soft_dice_loss.1} parent=5 // pred_check_branch
      %271 = sbr.rel (%p269) target = $region44
    $region43: #{soft_dice_loss.1} parent=5 // pred_region
      %s272 = ssub.s32 %s10, 2
      // Predicated region
      $region45: #{soft_dice_loss.1} parent=43 // pred_check
        %p273 = pneg %p107
      $region46: #{soft_dice_loss.1} parent=43 // pred_check_branch
        %275 = sbr.rel (%p273) target = $region48
      $region47: #{soft_dice_loss.1} parent=43 // pred_region
        %p276 = scmp.lt.s32.totalorder %s21, 1
        %s277 = scalar_select %p276, %s21, 1
        %s278 = smul.addr %s277, 8
        %s279 = scalar_lea.vmem %s2, %s278
      $region48: #{soft_dice_loss.1} parent=43 // pred_fallthru
        _
      // Predicated region
      $region49: #{soft_dice_loss.1} parent=43 // pred_check
        %p280 = pneg %p133
      $region50: #{soft_dice_loss.1} parent=43 // pred_check_branch
        %282 = sbr.rel (%p280) target = $region52
      $region51: #{soft_dice_loss.1} parent=43 // pred_region
        %p283 = scmp.lt.s32.totalorder %s21, 1
        %s284 = scalar_select %p283, %s21, 1
        %s285 = smul.addr %s284, 8
        %s286 = scalar_lea.vmem %s3, %s285
      $region52: #{soft_dice_loss.1} parent=43 // pred_fallthru
        _
    $region44: #{soft_dice_loss.1} parent=5 // pred_fallthru
      _
  $region6: #{soft_dice_loss.1} parent=0 // loop_footer
    %s14 = sadd.s32 1, %s10
  $region7: #{soft_dice_loss.1} parent=0 // loop_footer_branch
    %9 = sbr.rel target = $region3
  $region8: #{soft_dice_loss.1} parent=0 // loop_exit
    _

</llo_original>
